<compile_context>
chip_gen: v7x
topology: tpu7x:2x2x1
jax: 0.10.0
libtpu: 0.0.40
codegen_flags: <defaults>
</compile_context>

<pallas_src>
import math
import functools

import jax
import jax.numpy as jnp
from jax.experimental import pallas as pl
from jax.experimental.pallas import tpu as pltpu


def _round_up(x, m):
    return ((x + m - 1) // m) * m


def _tile_and_pad(dim, align, cap=512):
    """Tile size (multiple of `align`) and padded extent (multiple of the tile).

    Pads UP to the target tile instead of shrinking the tile to a divisor, so
    awkward sizes never collapse to tiny 8x128 tiles; waste is < one tile.
    """
    if dim <= cap:
        t = _round_up(dim, align)
        return t, t
    return cap, _round_up(dim, cap)


def _fold_tm(total_m, base_tm, cap=512):
    """Largest multiple of base_tm that divides total_m and is <= cap."""
    best = base_tm
    mult = 2
    while base_tm * mult <= cap:
        if total_m % (base_tm * mult) == 0:
            best = base_tm * mult
        mult += 1
    return best


@functools.lru_cache(maxsize=None)
def _vmem_capacity_bytes():
    """Physical per-core VMEM (64 MiB on v7x, 128 MiB on v5e/v6e)."""
    try:
        info = pltpu.get_tpu_info()
        cap = int(getattr(info, "vmem_capacity_bytes", 0) or 0)
        if cap > 0:
            return cap
    except Exception:
        pass
    return 64 * 1024 * 1024   # conservative fallback (v7x per-TensorCore)


def _pad_to(arr, target_shape):
    """Zero-pad to target_shape; no-op (no copy emitted) when already aligned."""
    pads = tuple((0, t - s) for s, t in zip(arr.shape, target_shape))
    if any(hi for _, hi in pads):
        return jnp.pad(arr, pads)
    return arr


def _bmm_kernel(a_ref, b_ref, *rest, rhs_batched, has_bias, rhs_k_resident,
                tk, cast_dtype, single_k, acc_in_out):
    """One (batch, m, n) output tile of out = a @ b (+ bias) over the k grid axis.

    a_ref:    (1, TM, TK)                       LHS tile (HBM dtype, cast in-kernel)
    b_ref:    (1, TK|Kp, TN) or (TK|Kp, TN)     RHS tile (K-resident when Kp)
    bias_ref: (1, 1, TN) f32                    only when has_bias
    o_ref:    (1, TM, TN)                       output tile (index map ignores k)
    acc_ref:  (TM, TN) f32 scratch              only when multi-k and out != f32
    """
    if has_bias:
        bias_ref, *rest = rest
    o_ref, *rest = rest
    acc_ref = rest[0] if rest else None

    k = pl.program_id(3)

    # RHS for this k step: slice the K-resident block, or take the streamed tile.
    if rhs_k_resident:
        start = pl.multiple_of(k * tk, tk)
        if rhs_batched:
            rhs = b_ref[:, pl.ds(start, tk), :][0]
        else:
            rhs = b_ref[pl.ds(start, tk), :]
    else:
        rhs = b_ref[0] if rhs_batched else b_ref[...]

    a = a_ref[0]
    if cast_dtype is not None:          # VPU cast, hidden under MXU/DMA
        if a.dtype != cast_dtype:
            a = a.astype(cast_dtype)
        if rhs.dtype != cast_dtype:
            rhs = rhs.astype(cast_dtype)

    part = jnp.dot(a, rhs, preferred_element_type=jnp.float32)

    if single_k:                        # no accumulation: single store per tile
        if has_bias:
            part = part + bias_ref[0].astype(jnp.float32)
        o_ref[0] = part.astype(o_ref.dtype)
        return

    # Multi-k: accumulate into the k-resident output block (f32 outputs) or an
    # f32 VMEM scratch; bias is folded into the k == 0 init.
    if acc_in_out:
        def _get():
            return o_ref[0]

        def _put(v):
            o_ref[0] = v
    else:
        def _get():
            return acc_ref[...]

        def _put(v):
            acc_ref[...] = v

    @pl.when(k == 0)
    def _init():
        shp = (o_ref.shape[1], o_ref.shape[2])
        if has_bias:
            _put(jnp.broadcast_to(bias_ref[0].astype(jnp.float32), shp))
        else:
            _put(jnp.zeros(shp, jnp.float32))

    _put(_get() + part)

    if not acc_in_out:
        @pl.when(k == pl.num_programs(3) - 1)
        def _finalize():
            o_ref[0] = acc_ref[...].astype(o_ref.dtype)


def _pallas_bmm(a, b, bias=None, *, tm, tn, tk, row_align,
                compute_dtype=None, out_dtype=None):
    """out[p] = a[p] @ b (+ bias) on pre-padded, tile-aligned operands.

    a: (Bg, Mp, Kp); b: (Kp, Nout) shared or (Bg, Kp, Nout); bias: (1,1,Nout)|None.
    Returns the PADDED (Bg, Mp, Nout) result (no slicing) so it can be chained
    into the next GEMM without an extra HBM pass.
    """
    Bg, Mp, Kp = a.shape
    rhs_batched = (b.ndim == 3)
    Nout = b.shape[-1]
    out_dtype = jnp.dtype(out_dtype if out_dtype is not None else a.dtype)
    cast_dtype = jnp.dtype(compute_dtype) if compute_dtype is not None else None
    has_bias = bias is not None

    assert Mp % tm == 0 and Nout % tn == 0 and Kp % tk == 0
    mt, nt, nk = Mp // tm, Nout // tn, Kp // tk

    # v7x has two TensorCores: make sure the "parallel" grid has >= 2 blocks so
    # both cores get work (a single extra grid step is negligible on v5e/v6e).
    if Bg * mt * nt == 1 and tm % (2 * row_align) == 0:
        tm //= 2
        mt = 2

    single_k = (nk == 1)
    acc_in_out = (not single_k) and (out_dtype == jnp.float32)
    need_scratch = (not single_k) and (not acc_in_out)

    a_isz = a.dtype.itemsize
    b_isz = b.dtype.itemsize
    o_isz = out_dtype.itemsize
    cap = _vmem_capacity_bytes()

    # Keep the whole K strip of the RHS resident in VMEM across the m/k steps
    # (otherwise it is re-streamed from HBM once per M tile) when it fits in
    # roughly a quarter of VMEM (~16 MiB on v7x, ~32 MiB on v5e/v6e).
    def _working(res_rows):
        return (2 * tm * tk * a_isz + 2 * res_rows * tn * b_isz
                + 2 * tm * tn * o_isz + (tm * tn * 4 if need_scratch else 0))

    rhs_k_resident = (not single_k) and (2 * Kp * tn * b_isz <= cap // 4)
    working = _working(Kp if rhs_k_resident else tk)
    if rhs_k_resident and working > int(cap * 0.6):
        rhs_k_resident = False
        working = _working(tk)

    a_spec = pl.BlockSpec((1, tm, tk), lambda bb, m, n, k: (bb, m, k))
    if rhs_batched:
        if rhs_k_resident:
            b_spec = pl.BlockSpec((1, Kp, tn), lambda bb, m, n, k: (bb, 0, n))
        else:
            b_spec = pl.BlockSpec((1, tk, tn), lambda bb, m, n, k: (bb, k, n))
    else:
        if rhs_k_resident:
            b_spec = pl.BlockSpec((Kp, tn), lambda bb, m, n, k: (0, n))
        else:
            b_spec = pl.BlockSpec((tk, tn), lambda bb, m, n, k: (k, n))

    inputs = [a, b]
    in_specs = [a_spec, b_spec]
    if has_bias:
        inputs.append(bias)
        in_specs.append(pl.BlockSpec((1, 1, tn), lambda bb, m, n, k: (0, 0, n)))

    out_spec = pl.BlockSpec((1, tm, tn), lambda bb, m, n, k: (bb, m, n))
    grid = (Bg, mt, Nout // tn, nk)
    scratch = [pltpu.VMEM((tm, tn), jnp.float32)] if need_scratch else []

    cost = pl.CostEstimate(
        flops=2 * Bg * Mp * Kp * Nout,
        transcendentals=0,
        bytes_accessed=int(a.size * a_isz + b.size * b_isz
                           + Bg * Mp * Nout * o_isz
                           + (bias.size * bias.dtype.itemsize if has_bias else 0)))

    # Generation-aware scoped-VMEM limit with headroom for Mosaic internals
    # (~50 of 64 MiB on v7x, ~100 of 128 MiB on v5e/v6e).
    vmem_limit = min(int(cap * 0.9),
                     max(int(cap * 0.78), working + (8 << 20)))

    kernel = functools.partial(
        _bmm_kernel, rhs_batched=rhs_batched, has_bias=has_bias,
        rhs_k_resident=rhs_k_resident, tk=tk, cast_dtype=cast_dtype,
        single_k=single_k, acc_in_out=acc_in_out)

    return pl.pallas_call(
        kernel,
        out_shape=jax.ShapeDtypeStruct((Bg, Mp, Nout), out_dtype),
        grid_spec=pltpu.PrefetchScalarGridSpec(
            num_scalar_prefetch=0,
            grid=grid,
            in_specs=in_specs,
            out_specs=out_spec,
            scratch_shapes=scratch),
        compiler_params=pltpu.CompilerParams(
            dimension_semantics=("parallel", "parallel", "parallel", "arbitrary"),
            vmem_limit_bytes=vmem_limit),
        cost_estimate=cost,
    )(*inputs)


@functools.partial(jax.jit, static_argnames=("compute_dtype",))
def graph_convolution(x, adj, weight, bias=None, *, compute_dtype=None):
    """out = adj @ (x @ weight) [+ bias]   (GraphConvolution.forward)

    x: (B, N, F_in); adj: (B, N, N); weight: (F_in, F_out); bias: (1,1,F_out)|None
    compute_dtype: optional MXU operand dtype (jnp.bfloat16 recommended on
        v6e/v7x). Operands stay in their HBM dtype and are cast inside the
        kernel; the intermediate is produced directly in compute_dtype;
        accumulation is always f32 and the output keeps x.dtype.
    """
    B, N, F_in = x.shape
    F_out = weight.shape[1]
    out_dtype = x.dtype
    cdt = jnp.dtype(compute_dtype) if compute_dtype is not None else jnp.dtype(x.dtype)
    sub = 16 if cdt == jnp.bfloat16 else 8     # sublane alignment (bf16 packs 16 rows)

    # The node dim is the M dim of both GEMMs and the K dim of adj@support; a
    # single shared padding keeps the intermediate chainable with zero copies.
    tmn, Np = _tile_and_pad(N, sub)
    tno, Fout_p = _tile_and_pad(F_out, 128)    # lane-dense output features

    bias_p = None
    if bias is not None:
        bias_p = _pad_to(bias, (1, 1, Fout_p)).astype(jnp.float32)

    adj_p = _pad_to(adj, (B, Np, Np))          # dtype untouched; cast in-kernel

    if F_out <= F_in:
        # support = x @ W (shared weight: fold batch into rows), then adj @ support.
        tki, Fin_p = _tile_and_pad(F_in, sub)
        x_p = _pad_to(x, (B, Np, Fin_p))
        w_p = _pad_to(weight, (Fin_p, Fout_p))
        tmf = _fold_tm(B * Np, tmn)
        support = _pallas_bmm(
            x_p.reshape(1, B * Np, Fin_p), w_p,
            tm=tmf, tn=tno, tk=tki, row_align=sub,
            compute_dtype=compute_dtype, out_dtype=cdt,      # bf16 intermediate
        ).reshape(B, Np, Fout_p)
        out_p = _pallas_bmm(
            adj_p, support, bias_p,
            tm=tmn, tn=tno, tk=tmn, row_align=sub,
            compute_dtype=compute_dtype, out_dtype=out_dtype)
    else:
        # (adj @ x) @ W — same result, fewer FLOPs/bytes when F_out > F_in.
        tni, Fin_p = _tile_and_pad(F_in, 128)  # lane dim of tmp == K of tmp @ W
        x_p = _pad_to(x, (B, Np, Fin_p))
        w_p = _pad_to(weight, (Fin_p, Fout_p))
        tmp = _pallas_bmm(
            adj_p, x_p,
            tm=tmn, tn=tni, tk=tmn, row_align=sub,
            compute_dtype=compute_dtype, out_dtype=cdt)      # bf16 intermediate
        tmf = _fold_tm(B * Np, tmn)
        out_p = _pallas_bmm(
            tmp.reshape(1, B * Np, Fin_p), w_p, bias_p,
            tm=tmf, tn=tno, tk=tni, row_align=sub,
            compute_dtype=compute_dtype, out_dtype=out_dtype,
        ).reshape(B, Np, Fout_p)

    return out_p[:, :N, :F_out]                # single slice of the final result


def init_gcn_params(key, in_features, out_features, bias=False):
    """Mirror reset_parameters(): uniform(-stdv, stdv), stdv = 1/sqrt(out_features)."""
    stdv = 1.0 / math.sqrt(out_features)
    kw, kb = jax.random.split(key)
    weight = jax.random.uniform(
        kw, (in_features, out_features), jnp.float32, minval=-stdv, maxval=stdv)
    b = None
    if bias:
        b = jax.random.uniform(
            kb, (1, 1, out_features), jnp.float32, minval=-stdv, maxval=stdv)
    return weight, b


if __name__ == "__main__":
    key = jax.random.PRNGKey(0)
    k_x, k_adj, k_p, k_x2, k_adj2 = jax.random.split(key, 5)
    hi = jax.lax.Precision.HIGHEST

    def ref_gcn(xx, aa, ww, bb=None):
        support = jnp.einsum("bni,io->bno", xx, ww, precision=hi)
        out = jnp.einsum("bnm,bmo->bno", aa, support, precision=hi)
        return out if bb is None else out + bb

    # --- small shapes: B=2, N=16 nodes, F_in=8 -> F_out=32 ((adj@x)@W order) ---
    B, N, F_in, F_out = 2, 16, 8, 32
    x = jax.random.normal(k_x, (B, N, F_in), jnp.float32)
    adj = jax.random.uniform(k_adj, (B, N, N), jnp.float32)

    weight, _ = init_gcn_params(k_p, F_in, F_out, bias=False)
    out = graph_convolution(x, adj, weight)
    jax.block_until_ready(out)
    assert out.shape == (B, N, F_out)
    ref = ref_gcn(x, adj, weight)
    assert jnp.allclose(out, ref, atol=1e-3, rtol=1e-3), \
        f"f32 no-bias max|diff|={float(jnp.max(jnp.abs(out - ref)))}"

    weight_b, bias_b = init_gcn_params(k_p, F_in, F_out, bias=True)
    out_b = graph_convolution(x, adj, weight_b, bias_b)
    jax.block_until_ready(out_b)
    ref_b = ref_gcn(x, adj, weight_b, bias_b)
    assert jnp.allclose(out_b, ref_b, atol=1e-3, rtol=1e-3), \
        f"f32 bias max|diff|={float(jnp.max(jnp.abs(out_b - ref_b)))}"

    # --- F_out <= F_in path (adj @ (x@W) order), bias=True ---
    w2, b2 = init_gcn_params(k_p, F_out, F_in, bias=True)      # 32 -> 8
    x2 = jax.random.normal(k_x2, (B, N, F_out), jnp.float32)
    out2 = graph_convolution(x2, adj, w2, b2)
    jax.block_until_ready(out2)
    ref2 = ref_gcn(x2, adj, w2, b2)
    assert jnp.allclose(out2, ref2, atol=1e-3, rtol=1e-3), \
        f"f32 (F_out<=F_in) max|diff|={float(jnp.max(jnp.abs(out2 - ref2)))}"

    # --- bf16 MXU operands (in-kernel cast, bf16 intermediate), f32 accumulation ---
    out_bf = graph_convolution(x, adj, weight_b, bias_b, compute_dtype=jnp.bfloat16)
    jax.block_until_ready(out_bf)
    assert jnp.allclose(out_bf, ref_b, atol=5e-2, rtol=5e-2), \
        f"bf16 max|diff|={float(jnp.max(jnp.abs(out_bf - ref_b)))}"

    # --- medium graph: exercises multi-k reduction (nodes > 512), K-resident
    #     RHS and accumulate-into-output paths ---
    B2, N2, Fi2, Fo2 = 2, 640, 64, 32
    xm = jax.random.normal(k_x2, (B2, N2, Fi2), jnp.float32)
    adjm = jax.random.uniform(k_adj2, (B2, N2, N2), jnp.float32)
    wm, bm = init_gcn_params(k_p, Fi2, Fo2, bias=True)
    refm = ref_gcn(xm, adjm, wm, bm)

    outm = graph_convolution(xm, adjm, wm, bm)
    jax.block_until_ready(outm)
    assert jnp.allclose(outm, refm, atol=1e-2, rtol=1e-2), \
        f"f32 medium max|diff|={float(jnp.max(jnp.abs(outm - refm)))}"

    outm_bf = graph_convolution(xm, adjm, wm, bm, compute_dtype=jnp.bfloat16)
    jax.block_until_ready(outm_bf)
    # bf16 operands over a 640-long reduction: loose absolute tolerance.
    assert jnp.allclose(outm_bf, refm, atol=2.5e-1, rtol=5e-2), \
        f"bf16 medium max|diff|={float(jnp.max(jnp.abs(outm_bf - refm)))}"

    print("KERNEL_OK")
</pallas_src>

<mosaic_0001>
module attributes {stable_mosaic.version = 11 : i64} {
  func.func @_bmm_kernel(%arg0: i32, %arg1: i32, %arg2: i32, %arg3: i32, %arg4: memref<1x16x16xf32, #tpu.memory_space<vmem>>, %arg5: memref<1x16x128xf32, #tpu.memory_space<vmem>>, %arg6: memref<1x16x128xf32, #tpu.memory_space<vmem>>) attributes {dimension_semantics = [#tpu.dimension_semantics<parallel>, #tpu.dimension_semantics<parallel>, #tpu.dimension_semantics<parallel>, #tpu.dimension_semantics<arbitrary>], iteration_bounds = array<i64: 2, 1, 1, 1>, scalar_prefetch = 0 : i64, scratch_operands = 0 : i64, tpu.core_type = #tpu.core_type<tc>, window_params = [{transform_indices = @transform_0, window_bounds = array<i64: 1, 16, 16>}, {transform_indices = @transform_1, window_bounds = array<i64: 1, 16, 128>}, {transform_indices = @transform_2, window_bounds = array<i64: 1, 16, 128>}]} {
    %c0 = arith.constant 0 : index
    %c0_0 = arith.constant 0 : index
    %c0_1 = arith.constant 0 : index
    %0 = vector.load %arg5[%c0, %c0_0, %c0_1] : memref<1x16x128xf32, #tpu.memory_space<vmem>>, vector<1x16x128xf32>
    %1 = vector.shape_cast %0 : vector<1x16x128xf32> to vector<16x128xf32>
    %c0_2 = arith.constant 0 : index
    %c0_3 = arith.constant 0 : index
    %c0_4 = arith.constant 0 : index
    %2 = vector.load %arg4[%c0_2, %c0_3, %c0_4] : memref<1x16x16xf32, #tpu.memory_space<vmem>>, vector<1x16x16xf32>
    %3 = vector.shape_cast %2 : vector<1x16x16xf32> to vector<16x16xf32>
    %cst = arith.constant dense<0.000000e+00> : vector<16x128xf32>
    %4 = tpu.matmul %3, %1, %cst {dimension_numbers = #tpu.dot_dimension_numbers<[1], [0], [0], [1], [0, 0, 1, 1], [], []>} : vector<16x16xf32>, vector<16x128xf32>, vector<16x128xf32> -> vector<16x128xf32>
    %c0_5 = arith.constant 0 : index
    %c0_6 = arith.constant 0 : index
    %c0_7 = arith.constant 0 : index
    %5 = vector.load %arg6[%c0_5, %c0_6, %c0_7] : memref<1x16x128xf32, #tpu.memory_space<vmem>>, vector<1x16x128xf32>
    %6 = vector.shape_cast %5 : vector<1x16x128xf32> to vector<16x128xf32>
    %7 = vector.shape_cast %4 : vector<16x128xf32> to vector<1x16x128xf32>
    tpu.vector_store %arg6[%c0_5, %c0_6, %c0_7], %7 {strides = array<i32>} : memref<1x16x128xf32, #tpu.memory_space<vmem>>, vector<1x16x128xf32>,
    return
  }
  func.func @transform_0(%arg0: i32, %arg1: i32, %arg2: i32, %arg3: i32) -> (i32, i32, i32) {
    %c0_i32 = arith.constant 0 : i32
    return %arg0, %arg1, %arg3 : i32, i32, i32
  }
  func.func @transform_1(%arg0: i32, %arg1: i32, %arg2: i32, %arg3: i32) -> (i32, i32, i32) {
    %c0_i32 = arith.constant 0 : i32
    return %arg0, %arg3, %arg2 : i32, i32, i32
  }
  func.func @transform_2(%arg0: i32, %arg1: i32, %arg2: i32, %arg3: i32) -> (i32, i32, i32) {
    %c0_i32 = arith.constant 0 : i32
    return %arg0, %arg1, %arg2 : i32, i32, i32
  }
}

module attributes {stable_mosaic.version = 11 : i64} {
  func.func @_bmm_kernel(%arg0: i32, %arg1: i32, %arg2: i32, %arg3: i32, %arg4: memref<1x16x128xf32, #tpu.memory_space<vmem>>, %arg5: memref<128x128xf32, #tpu.memory_space<vmem>>, %arg6: memref<1x16x128xf32, #tpu.memory_space<vmem>>) attributes {dimension_semantics = [#tpu.dimension_semantics<parallel>, #tpu.dimension_semantics<parallel>, #tpu.dimension_semantics<parallel>, #tpu.dimension_semantics<arbitrary>], iteration_bounds = array<i64: 1, 2, 1, 1>, scalar_prefetch = 0 : i64, scratch_operands = 0 : i64, tpu.core_type = #tpu.core_type<tc>, window_params = [{transform_indices = @transform_0, window_bounds = array<i64: 1, 16, 128>}, {transform_indices = @transform_1, window_bounds = array<i64: 128, 128>}, {transform_indices = @transform_2, window_bounds = array<i64: 1, 16, 128>}]} {
    %c0 = arith.constant 0 : index
    %c0_0 = arith.constant 0 : index
    %0 = vector.load %arg5[%c0, %c0_0] : memref<128x128xf32, #tpu.memory_space<vmem>>, vector<128x128xf32>
    %c0_1 = arith.constant 0 : index
    %c0_2 = arith.constant 0 : index
    %c0_3 = arith.constant 0 : index
    %1 = vector.load %arg4[%c0_1, %c0_2, %c0_3] : memref<1x16x128xf32, #tpu.memory_space<vmem>>, vector<1x16x128xf32>
    %2 = vector.shape_cast %1 : vector<1x16x128xf32> to vector<16x128xf32>
    %cst = arith.constant dense<0.000000e+00> : vector<16x128xf32>
    %3 = tpu.matmul %2, %0, %cst {dimension_numbers = #tpu.dot_dimension_numbers<[1], [0], [0], [1], [0, 0, 1, 1], [], []>} : vector<16x128xf32>, vector<128x128xf32>, vector<16x128xf32> -> vector<16x128xf32>
    %c0_4 = arith.constant 0 : index
    %c0_5 = arith.constant 0 : index
    %c0_6 = arith.constant 0 : index
    %4 = vector.load %arg6[%c0_4, %c0_5, %c0_6] : memref<1x16x128xf32, #tpu.memory_space<vmem>>, vector<1x16x128xf32>
    %5 = vector.shape_cast %4 : vector<1x16x128xf32> to vector<16x128xf32>
    %6 = vector.shape_cast %3 : vector<16x128xf32> to vector<1x16x128xf32>
    tpu.vector_store %arg6[%c0_4, %c0_5, %c0_6], %6 {strides = array<i32>} : memref<1x16x128xf32, #tpu.memory_space<vmem>>, vector<1x16x128xf32>,
    return
  }
  func.func @transform_0(%arg0: i32, %arg1: i32, %arg2: i32, %arg3: i32) -> (i32, i32, i32) {
    %c0_i32 = arith.constant 0 : i32
    return %arg0, %arg1, %arg3 : i32, i32, i32
  }
  func.func @transform_1(%arg0: i32, %arg1: i32, %arg2: i32, %arg3: i32) -> (i32, i32) {
    %c0_i32 = arith.constant 0 : i32
    return %arg3, %arg2 : i32, i32
  }
  func.func @transform_2(%arg0: i32, %arg1: i32, %arg2: i32, %arg3: i32) -> (i32, i32, i32) {
    %c0_i32 = arith.constant 0 : i32
    return %arg0, %arg1, %arg2 : i32, i32, i32
  }
}

</mosaic_0001>

<llo_original>
// kernel: graph_convolution.3
$region0: #{graph_convolution.3}
  #allocation0 [shape = 'u32[]', space=smem, size = 0x4, offset = 0x4, fixed_abs, tag = 'smem constant byte address 0x4 - core index']
  #allocation1 [shape = 'u32[144,128]{1,0:T(1,128)}', space=vmem, size = 0x12000, scoped, tag = 'internal scratch']
  %s0 = inlined_call_operand.vmem [shape: f32[1,32,128], index: 0, kind: input, shape index: {}]
  %s1 = inlined_call_operand.vmem [shape: f32[128,128], index: 1, kind: input, shape index: {}]
  %s2 = inlined_call_operand.hbm [shape: f32[1,32,128], index: 2, kind: output, shape index: {}]
  %s3 = sld [smem:[#allocation0]]
  $region41: #{graph_convolution.3} parent=0
    _
  %s5 = ssub.s32 1, %s3
  %s6 = scalar_select 0, %s5, %s3
  $region1: #{graph_convolution.3} parent=0
    #allocation2 [shape = 'u8[16384]{0}', space=vmem, size = 0x4000, scoped, tag = 'output window, operand 0']
    #allocation3 [shape = 's32[2]{0}', space=sflag, size = 0x8, scoped, tag = 'scoped memory for graph_convolution.3']
    %7 = vsyncpa [#allocation3], 0
    %s8 = scalar_lea.sflag [#allocation3], 1
    %9 = vsyncpa %s8, 0
    loop: start=0, step=1, limit=4
    $region2: #{graph_convolution.3} parent=1 // loop_pre_header
      _
    $region3: #{graph_convolution.3} parent=1 // loop_header
      %s11 = sphi 0, %s15
      %p12 = scmp.ge.s32.totalorder %s11, 4
      %s18 = sphi 0, %s44
      %s19 = sphi 0, %s40
      %s20 = sphi 0, %s36
      %s21 = sphi 0, %s32
      %s22 = sphi 0, %s18
      %s23 = sphi 0, %s19
      %s24 = sphi 0, %s20
      %s25 = sphi 0, %s21
      %s26 = sphi 0, %s22
      %s27 = sphi 0, %s23
      %s28 = sphi 0, %s24
      %s29 = sphi 0, %s25
      %s51 = sphi 0, %s53
      %s54 = sphi 0, %s51
      %s55 = sphi 0, %s54
      %s71 = sphi 0, %s55
      %s79 = sphi 0, %s81
      %s82 = sphi 0, %s79
      %s83 = sphi 0, %s82
      %s99 = sphi 0, %s83
      %s109 = sphi 0, %s111
      %s112 = sphi 0, %s109
      %s113 = sphi 0, %s112
      %s129 = sphi 0, %s113
    $region4: #{graph_convolution.3} parent=1 // loop_header_branch
      %14 = sbr.rel (%p12) target = $region8
    $region5: #{graph_convolution.3} parent=1 // loop_body
      %s16 = ssub.s32 %s11, 1
      %s17 = ssub.s32 %s11, 2
      %s30 = sadd.s32 1, %s21
      %p31 = scmp.ge.s32.totalorder %s30, 1
      %s32 = scalar_select %p31, 0, %s30
      %s33 = sadd.s32 1, %s20
      %s34 = scalar_select %p31, %s33, %s20
      %p35 = scmp.ge.s32.totalorder %s34, 1
      %s36 = scalar_select %p35, 0, %s34
      %s37 = sadd.s32 1, %s19
      %s38 = scalar_select %p35, %s37, %s19
      %p39 = scmp.ge.s32.totalorder %s38, 2
      %s40 = scalar_select %p39, 0, %s38
      %s41 = sadd.s32 1, %s18
      %s42 = scalar_select %p39, %s41, %s18
      %p43 = scmp.ge.s32.totalorder %s42, 1
      %s44 = scalar_select %p43, 0, %s42
      %s45 = ssub.s32 %s18, %s44
      %s46 = ssub.s32 %s19, %s40
      %s47 = sor.u32 %s45, %s46
      %s48 = ssub.s32 %s21, %s32
      %s49 = sor.u32 %s47, %s48
      %p50 = scmp.eq.s32.totalorder %s49, 0
      %s52 = sadd.s32 %s51, 1
      %s53 = scalar_select %p50, %s51, %s52
      %p56 = pneg %p50
      %p57 = scmp.eq.s32.totalorder %s11, 1
      %p58 = por %p56, %p57
      %p59 = scmp.ne.s32.totalorder %s51, %s54
      %p60 = scmp.eq.s32.totalorder %s11, 0
      %p61 = por %p59, %p60
      %p62 = scmp.ne.s32.totalorder %s51, %s54
      %p63 = scmp.eq.s32.totalorder %s16, 1
      %p64 = por %p62, %p63
      %p65 = scmp.ne.s32.totalorder %s54, %s55
      %p66 = scmp.eq.s32.totalorder %s16, 0
      %p67 = por %p65, %p66
      %p68 = scmp.ne.s32.totalorder %s54, %s55
      %p69 = scmp.eq.s32.totalorder %s17, 1
      %p70 = por %p68, %p69
      %p72 = scmp.ne.s32.totalorder %s55, %s71
      %p73 = scmp.eq.s32.totalorder %s17, 0
      %p74 = por %p72, %p73
      %s75 = ssub.s32 %s21, %s32
      %s76 = ssub.s32 %s20, %s36
      %s77 = sor.u32 %s75, %s76
      %p78 = scmp.eq.s32.totalorder %s77, 0
      %s80 = sadd.s32 %s79, 1
      %s81 = scalar_select %p78, %s79, %s80
      %p84 = pneg %p78
      %p85 = scmp.eq.s32.totalorder %s11, 1
      %p86 = por %p84, %p85
      %p87 = scmp.ne.s32.totalorder %s79, %s82
      %p88 = scmp.eq.s32.totalorder %s11, 0
      %p89 = por %p87, %p88
      %p90 = scmp.ne.s32.totalorder %s79, %s82
      %p91 = scmp.eq.s32.totalorder %s16, 1
      %p92 = por %p90, %p91
      %p93 = scmp.ne.s32.totalorder %s82, %s83
      %p94 = scmp.eq.s32.totalorder %s16, 0
      %p95 = por %p93, %p94
      %p96 = scmp.ne.s32.totalorder %s82, %s83
      %p97 = scmp.eq.s32.totalorder %s17, 1
      %p98 = por %p96, %p97
      %p100 = scmp.ne.s32.totalorder %s83, %s99
      %p101 = scmp.eq.s32.totalorder %s17, 0
      %p102 = por %p100, %p101
      %s103 = ssub.s32 %s18, %s44
      %s104 = ssub.s32 %s19, %s40
      %s105 = sor.u32 %s103, %s104
      %s106 = ssub.s32 %s20, %s36
      %s107 = sor.u32 %s105, %s106
      %p108 = scmp.eq.s32.totalorder %s107, 0
      %s110 = sadd.s32 %s109, 1
      %s111 = scalar_select %p108, %s109, %s110
      %p114 = pneg %p108
      %p115 = scmp.eq.s32.totalorder %s11, 1
      %p116 = por %p114, %p115
      %p117 = scmp.ne.s32.totalorder %s109, %s112
      %p118 = scmp.eq.s32.totalorder %s11, 0
      %p119 = por %p117, %p118
      %p120 = scmp.ne.s32.totalorder %s109, %s112
      %p121 = scmp.eq.s32.totalorder %s16, 1
      %p122 = por %p120, %p121
      %p123 = scmp.ne.s32.totalorder %s112, %s113
      %p124 = scmp.eq.s32.totalorder %s16, 0
      %p125 = por %p123, %p124
      %p126 = scmp.ne.s32.totalorder %s112, %s113
      %p127 = scmp.eq.s32.totalorder %s17, 1
      %p128 = por %p126, %p127
      %p130 = scmp.ne.s32.totalorder %s113, %s129
      %p131 = scmp.eq.s32.totalorder %s17, 0
      %p132 = por %p130, %p131
      %p133 = scmp.le.s32.totalorder 1, %s11
      %p134 = scmp.lt.s32.totalorder %s11, 3
      %p135 = pnand %p133, %p134
      %p136 = pneg %p135
      // Predicated region
      $region9: #{graph_convolution.3} parent=5 // pred_check
        _
      $region10: #{graph_convolution.3} parent=5 // pred_check_branch
        %138 = sbr.rel (%p135) target = $region12
      $region11: #{graph_convolution.3} parent=5 // pred_region
        %s139 = ssub.s32 %s11, 1
        // Predicated region
        $region13: #{graph_convolution.3} parent=11 // pred_check
          %p140 = pneg %p95
        $region14: #{graph_convolution.3} parent=11 // pred_check_branch
          %142 = sbr.rel (%p140) target = $region16
        $region15: #{graph_convolution.3} parent=11 // pred_region
          %s143 = smul.u32 16, %s25
          %p144 = scmp.lt.s32.totalorder %s143, 15
          %s145 = scalar_select %p144, %s143, 15
          %p146 = scmp.lt.s32.totalorder %s24, 0
          %s147 = scalar_select %p146, %s24, 0
          %s148 = sadd.s32 %s147, %s145
          %s149 = smul.addr %s148, 8
          %s150 = scalar_lea.vmem %s1, %s149
          %s151 = smul.u32 16, %s25
        $region16: #{graph_convolution.3} parent=11 // pred_fallthru
          _
      $region12: #{graph_convolution.3} parent=5 // pred_fallthru
        _
      %p152 = scmp.lt.s32.totalorder %s11, 2
      // Predicated region
      $region17: #{graph_convolution.3} parent=5 // pred_check
        %p153 = pneg %p152
      $region18: #{graph_convolution.3} parent=5 // pred_check_branch
        %155 = sbr.rel (%p153) target = $region20
      $region19: #{graph_convolution.3} parent=5 // pred_region
        // Predicated region
        $region21: #{graph_convolution.3} parent=19 // pred_check
          %p156 = pneg %p61
        $region22: #{graph_convolution.3} parent=19 // pred_check_branch
          %158 = sbr.rel (%p156) target = $region24
        $region23: #{graph_convolution.3} parent=19 // pred_region
          %s159 = smul.u32 2, %s19
          %p160 = scmp.lt.s32.totalorder %s18, 0
          %s161 = scalar_select %p160, %s18, 0
          %p162 = scmp.lt.s32.totalorder %s159, 3
          %s163 = scalar_select %p162, %s159, 3
          %p164 = scmp.lt.s32.totalorder %s21, 0
          %s165 = scalar_select %p164, %s21, 0
          %s166 = sadd.s32 %s165, %s163
          %s167 = smul.addr %s161, 4
          %s168 = sadd.s32 %s166, %s167
          %s169 = smul.addr %s168, 8
          %s170 = scalar_lea.vmem %s0, %s169
          %s171 = smul.u32 2, %s19
        $region24: #{graph_convolution.3} parent=19 // pred_fallthru
          _
      $region20: #{graph_convolution.3} parent=5 // pred_fallthru
        _
      %p172 = scmp.le.s32.totalorder 1, %s11
      %p173 = scmp.lt.s32.totalorder %s11, 3
      %p174 = pnand %p172, %p173
      %p175 = pneg %p174
      // Predicated region
      $region25: #{graph_convolution.3} parent=5 // pred_check
        _
      $region26: #{graph_convolution.3} parent=5 // pred_check_branch
        %177 = sbr.rel (%p174) target = $region28
      $region27: #{graph_convolution.3} parent=5 // pred_region
        %s178 = ssub.s32 %s11, 1
        %s179 = smul.u32 2, %s23
        %p180 = scmp.lt.s32.totalorder %s22, 0
        %s181 = scalar_select %p180, %s22, 0
        %p182 = scmp.lt.s32.totalorder %s179, 3
        %s183 = scalar_select %p182, %s179, 3
        %p184 = scmp.lt.s32.totalorder %s25, 0
        %s185 = scalar_select %p184, %s25, 0
        %s186 = sadd.s32 %s185, %s183
        %s187 = smul.addr %s181, 4
        %s188 = sadd.s32 %s186, %s187
        %s189 = smul.addr %s188, 8
        %s190 = scalar_lea.vmem %s0, %s189
        %p191 = pneg %p67
        %p192 = pneg %p64
        %s193 = smul.u32 16, %s25
        %p194 = scmp.lt.s32.totalorder %s193, 15
        %s195 = scalar_select %p194, %s193, 15
        %p196 = scmp.lt.s32.totalorder %s24, 0
        %s197 = scalar_select %p196, %s24, 0
        %s198 = sadd.s32 %s197, %s195
        %s199 = smul.addr %s198, 8
        %s200 = scalar_lea.vmem %s1, %s199
        %p201 = pneg %p95
        %p202 = pneg %p92
        %p203 = pneg %p125
        %p204 = pneg %p122
        %s205 = sand.u32 %s112, 1
        %s206 = scalar_lea.sflag [#allocation3], %s205
        %s207 = sand.u32 %s112, 1
        %s208 = smul.addr %s207, 16
        %s209 = scalar_lea.vmem [#allocation2], %s208
        %s210 = smul.u32 2, %s23
        %p211 = scmp.lt.s32.totalorder %s22, 0
        %s212 = scalar_select %p211, %s22, 0
        %p213 = scmp.lt.s32.totalorder %s210, 3
        %s214 = scalar_select %p213, %s210, 3
        %p215 = scmp.lt.s32.totalorder %s25, 0
        %s216 = scalar_select %p215, %s25, 0
        %s217 = sadd.s32 %s216, %s214
        %s218 = smul.addr %s212, 4
        %s219 = sadd.s32 %s217, %s218
        %s220 = smul.addr %s219, 8
        %s221 = scalar_lea.vmem %s0, %s220
        %s222 = smul.u32 2, %s23
        %s223 = smul.u32 16, %s25
        %p224 = scmp.lt.s32.totalorder %s223, 15
        %s225 = scalar_select %p224, %s223, 15
        %p226 = scmp.lt.s32.totalorder %s24, 0
        %s227 = scalar_select %p226, %s24, 0
        %s228 = sadd.s32 %s227, %s225
        %s229 = smul.addr %s228, 8
        %s230 = scalar_lea.vmem %s1, %s229
        %s231 = smul.u32 16, %s25
        %s232 = smul.u32 2, %s23
        %v233 = vld [vmem:[%s230] sm:$0xff]
        %v234 = vld [vmem:[%s230 + $0x8] sm:$0xff]
        %v235 = vld [vmem:[%s230 + $0x10] sm:$0xff]
        %v236 = vld [vmem:[%s230 + $0x18] sm:$0xff]
        %v237 = vld [vmem:[%s230 + $0x20] sm:$0xff]
        %v238 = vld [vmem:[%s230 + $0x28] sm:$0xff]
        %v239 = vld [vmem:[%s230 + $0x30] sm:$0xff]
        %v240 = vld [vmem:[%s230 + $0x38] sm:$0xff]
        %v241 = vld [vmem:[%s230 + $0x40] sm:$0xff]
        %v242 = vld [vmem:[%s230 + $0x48] sm:$0xff]
        %v243 = vld [vmem:[%s230 + $0x50] sm:$0xff]
        %v244 = vld [vmem:[%s230 + $0x58] sm:$0xff]
        %v245 = vld [vmem:[%s230 + $0x60] sm:$0xff]
        %v246 = vld [vmem:[%s230 + $0x68] sm:$0xff]
        %v247 = vld [vmem:[%s230 + $0x70] sm:$0xff]
        %v248 = vld [vmem:[%s230 + $0x78] sm:$0xff]
        %v249 = vld [vmem:[%s221] sm:$0xff]
        %v250 = vld [vmem:[%s221 + $0x8] sm:$0xff]
        %251 = vmatprep.subr.mxu0 0.0
        %252 = vmatpush1.msra.mxu0 %v233
        %253 = vmatprep.subr.mxu0 0.0
        %254 = vmatpush1.msra.mxu0 %v234
        %255 = vmatprep.subr.mxu0 0.0
        %256 = vmatpush1.msra.mxu0 %v235
        %257 = vmatprep.subr.mxu0 0.0
        %258 = vmatpush1.msra.mxu0 %v236
        %259 = vmatprep.subr.mxu0 0.0
        %260 = vmatpush1.msra.mxu0 %v237
        %261 = vmatprep.subr.mxu0 0.0
        %262 = vmatpush1.msra.mxu0 %v238
        %263 = vmatprep.subr.mxu0 0.0
        %264 = vmatpush1.msra.mxu0 %v239
        %265 = vmatprep.subr.mxu0 0.0
        %266 = vmatpush1.msra.mxu0 %v240
        %267 = vmatprep.subr.mxu0 0.0
        %268 = vmatpush1.msra.mxu0 %v241
        %269 = vmatprep.subr.mxu0 0.0
        %270 = vmatpush1.msra.mxu0 %v242
        %271 = vmatprep.subr.mxu0 0.0
        %272 = vmatpush1.msra.mxu0 %v243
        %273 = vmatprep.subr.mxu0 0.0
        %274 = vmatpush1.msra.mxu0 %v244
        %275 = vmatprep.subr.mxu0 0.0
        %276 = vmatpush1.msra.mxu0 %v245
        %277 = vmatprep.subr.mxu0 0.0
        %278 = vmatpush1.msra.mxu0 %v246
        %279 = vmatprep.subr.mxu0 0.0
        %280 = vmatpush1.msra.mxu0 %v247
        %281 = vmatprep.subr.mxu0 0.0
        %282 = vmatpush1.msra.mxu0 %v248
        %283 = vmatprep.subr.mxu0 0.0
        %284 = vmatpush1.msra.mxu0 0.0
        %285 = vmatprep.subr.mxu0 0.0
        %286 = vmatpush1.msra.mxu0 0.0
        %287 = vmatprep.subr.mxu0 0.0
        %288 = vmatpush1.msra.mxu0 0.0
        %289 = vmatprep.subr.mxu0 0.0
        %290 = vmatpush1.msra.mxu0 0.0
        %291 = vmatprep.subr.mxu0 0.0
        %292 = vmatpush1.msra.mxu0 0.0
        %293 = vmatprep.subr.mxu0 0.0
        %294 = vmatpush1.msra.mxu0 0.0
        %295 = vmatprep.subr.mxu0 0.0
        %296 = vmatpush1.msra.mxu0 0.0
        %297 = vmatprep.subr.mxu0 0.0
        %298 = vmatpush1.msra.mxu0 0.0
        %299 = vmatprep.subr.mxu0 0.0
        %300 = vmatpush1.msra.mxu0 0.0
        %301 = vmatprep.subr.mxu0 0.0
        %302 = vmatpush1.msra.mxu0 0.0
        %303 = vmatprep.subr.mxu0 0.0
        %304 = vmatpush1.msra.mxu0 0.0
        %305 = vmatprep.subr.mxu0 0.0
        %306 = vmatpush1.msra.mxu0 0.0
        %307 = vmatprep.subr.mxu0 0.0
        %308 = vmatpush1.msra.mxu0 0.0
        %309 = vmatprep.subr.mxu0 0.0
        %310 = vmatpush1.msra.mxu0 0.0
        %311 = vmatprep.subr.mxu0 0.0
        %312 = vmatpush1.msra.mxu0 0.0
        %313 = vmatprep.subr.mxu0 0.0
        %314 = vmatpush1.msra.mxu0 0.0
        %315 = vmatprep.mubr.f32.mxu0 0.0
        %316 = vmatmul.mubr.f32.gmra.mrb[0].mxu0 %v249
        %v317 = vpop.f32.mrb[0].mxu0
        %v318 = vadd.f32 0.0, %v317
        %v319 = vpop.f32.mrb[0].mxu0
        %320 = vmatprep.mubr.f32.mxu0 0.0
        %321 = vmatmul.mubr.f32.gmra.mrb[0].mxu0 %v250
        %v322 = vpop.f32.mrb[0].mxu0
        %v323 = vadd.f32 0.0, %v322
        %v324 = vpop.f32.mrb[0].mxu0
        %325 = vdwg.mxu0
        %326 = vst [vmem:[%s209] sm:$0xff] %v318
        %327 = vst [vmem:[%s209 + $0x8] sm:$0xff] %v323
        %s328 = sand.u32 %s112, 1
        %s329 = scalar_lea.sflag [#allocation3], %s328
        %s330 = sand.u32 %s112, 1
        %s331 = smul.addr %s330, 16
        %s332 = scalar_lea.vmem [#allocation2], %s331
        // Predicated region
        $region29: #{graph_convolution.3} parent=27 // pred_check
          %p333 = pneg %p122
        $region30: #{graph_convolution.3} parent=27 // pred_check_branch
          %335 = sbr.rel (%p333) target = $region32
        $region31: #{graph_convolution.3} parent=27 // pred_region
          %s336 = smul.u32 2, %s23
          %s338 = ssub.s32 256, 256
          %339 = vsyncadd %s329, %s338
          %s340 = sadd.s32 %s24, %s336
          %s341 = smul.addr %s22, 4
          %s342 = sadd.s32 %s340, %s341
          %s343 = smul.addr %s342, 128
          %s344 = scalar_lea.hbm %s2, %s343
          %s345 = sshll.u32 %s332, 4
          %s346 = int_to_ptr.vmem [resolvable:$true] %s345
          %351 = dma.vmem_to_hbm [thread:$0]  %s346, 256, %s344, %s329, 128, 128, 8
        $region32: #{graph_convolution.3} parent=27 // pred_fallthru
          _
      $region28: #{graph_convolution.3} parent=5 // pred_fallthru
        _
      %p352 = scmp.le.s32.totalorder 2, %s11
      // Predicated region
      $region33: #{graph_convolution.3} parent=5 // pred_check
        %p353 = pneg %p352
      $region34: #{graph_convolution.3} parent=5 // pred_check_branch
        %355 = sbr.rel (%p353) target = $region36
      $region35: #{graph_convolution.3} parent=5 // pred_region
        %s356 = ssub.s32 %s11, 2
        // Predicated region
        $region37: #{graph_convolution.3} parent=35 // pred_check
          %p357 = pneg %p128
        $region38: #{graph_convolution.3} parent=35 // pred_check_branch
          %359 = sbr.rel (%p357) target = $region40
        $region39: #{graph_convolution.3} parent=35 // pred_region
          %s360 = sand.u32 %s113, 1
          %s361 = scalar_lea.sflag [#allocation3], %s360
          %s362 = sand.u32 %s113, 1
          %s363 = smul.addr %s362, 16
          %s364 = scalar_lea.vmem [#allocation2], %s363
          %365 = dma.done %s361, 256
        $region40: #{graph_convolution.3} parent=35 // pred_fallthru
          _
      $region36: #{graph_convolution.3} parent=5 // pred_fallthru
        _
    $region6: #{graph_convolution.3} parent=1 // loop_footer
      %s15 = sadd.s32 1, %s11
    $region7: #{graph_convolution.3} parent=1 // loop_footer_branch
      %10 = sbr.rel target = $region3
    $region8: #{graph_convolution.3} parent=1 // loop_exit
      _
    %366 = vsyncpa [#allocation3], 1
    %s367 = scalar_lea.sflag [#allocation3], 1
    %368 = vsyncpa %s367, 1

// kernel: graph_convolution.2
$region0: #{graph_convolution.2}
  #allocation0 [shape = 'u32[]', space=smem, size = 0x4, offset = 0x4, fixed_abs, tag = 'smem constant byte address 0x4 - core index']
  #allocation1 [shape = 'u32[144,128]{1,0:T(1,128)}', space=vmem, size = 0x12000, scoped, tag = 'internal scratch']
  %s0 = inlined_call_operand.vmem [shape: f32[2,16,16], index: 0, kind: input, shape index: {}]
  %s1 = inlined_call_operand.vmem [shape: f32[2,16,128], index: 1, kind: input, shape index: {}]
  %s2 = inlined_call_operand.vmem [shape: f32[2,16,128], index: 2, kind: output, shape index: {}]
  %s3 = sld [smem:[#allocation0]]
  $region41: #{graph_convolution.2} parent=0
    _
  %s5 = ssub.s32 1, %s3
  %s6 = scalar_select 0, %s5, %s3
  loop: start=0, step=1, limit=4
  $region2: #{graph_convolution.2} parent=0 // loop_pre_header
    _
  $region3: #{graph_convolution.2} parent=0 // loop_header
    %s8 = sphi 0, %s12
    %p9 = scmp.ge.s32.totalorder %s8, 4
    %s15 = sphi 0, %s41
    %s16 = sphi 0, %s37
    %s17 = sphi 0, %s33
    %s18 = sphi 0, %s29
    %s19 = sphi 0, %s15
    %s20 = sphi 0, %s16
    %s21 = sphi 0, %s17
    %s22 = sphi 0, %s18
    %s23 = sphi 0, %s19
    %s24 = sphi 0, %s20
    %s25 = sphi 0, %s21
    %s26 = sphi 0, %s22
    %s48 = sphi 0, %s50
    %s51 = sphi 0, %s48
    %s52 = sphi 0, %s51
    %s68 = sphi 0, %s52
    %s78 = sphi 0, %s80
    %s81 = sphi 0, %s78
    %s82 = sphi 0, %s81
    %s98 = sphi 0, %s82
    %s108 = sphi 0, %s110
    %s111 = sphi 0, %s108
    %s112 = sphi 0, %s111
    %s128 = sphi 0, %s112
  $region4: #{graph_convolution.2} parent=0 // loop_header_branch
    %11 = sbr.rel (%p9) target = $region8
  $region5: #{graph_convolution.2} parent=0 // loop_body
    %s13 = ssub.s32 %s8, 1
    %s14 = ssub.s32 %s8, 2
    %s27 = sadd.s32 1, %s18
    %p28 = scmp.ge.s32.totalorder %s27, 1
    %s29 = scalar_select %p28, 0, %s27
    %s30 = sadd.s32 1, %s17
    %s31 = scalar_select %p28, %s30, %s17
    %p32 = scmp.ge.s32.totalorder %s31, 1
    %s33 = scalar_select %p32, 0, %s31
    %s34 = sadd.s32 1, %s16
    %s35 = scalar_select %p32, %s34, %s16
    %p36 = scmp.ge.s32.totalorder %s35, 1
    %s37 = scalar_select %p36, 0, %s35
    %s38 = sadd.s32 1, %s15
    %s39 = scalar_select %p36, %s38, %s15
    %p40 = scmp.ge.s32.totalorder %s39, 2
    %s41 = scalar_select %p40, 0, %s39
    %s42 = ssub.s32 %s15, %s41
    %s43 = ssub.s32 %s16, %s37
    %s44 = sor.u32 %s42, %s43
    %s45 = ssub.s32 %s18, %s29
    %s46 = sor.u32 %s44, %s45
    %p47 = scmp.eq.s32.totalorder %s46, 0
    %s49 = sadd.s32 %s48, 1
    %s50 = scalar_select %p47, %s48, %s49
    %p53 = pneg %p47
    %p54 = scmp.eq.s32.totalorder %s8, 1
    %p55 = por %p53, %p54
    %p56 = scmp.ne.s32.totalorder %s48, %s51
    %p57 = scmp.eq.s32.totalorder %s8, 0
    %p58 = por %p56, %p57
    %p59 = scmp.ne.s32.totalorder %s48, %s51
    %p60 = scmp.eq.s32.totalorder %s13, 1
    %p61 = por %p59, %p60
    %p62 = scmp.ne.s32.totalorder %s51, %s52
    %p63 = scmp.eq.s32.totalorder %s13, 0
    %p64 = por %p62, %p63
    %p65 = scmp.ne.s32.totalorder %s51, %s52
    %p66 = scmp.eq.s32.totalorder %s14, 1
    %p67 = por %p65, %p66
    %p69 = scmp.ne.s32.totalorder %s52, %s68
    %p70 = scmp.eq.s32.totalorder %s14, 0
    %p71 = por %p69, %p70
    %s72 = ssub.s32 %s15, %s41
    %s73 = ssub.s32 %s18, %s29
    %s74 = sor.u32 %s72, %s73
    %s75 = ssub.s32 %s17, %s33
    %s76 = sor.u32 %s74, %s75
    %p77 = scmp.eq.s32.totalorder %s76, 0
    %s79 = sadd.s32 %s78, 1
    %s80 = scalar_select %p77, %s78, %s79
    %p83 = pneg %p77
    %p84 = scmp.eq.s32.totalorder %s8, 1
    %p85 = por %p83, %p84
    %p86 = scmp.ne.s32.totalorder %s78, %s81
    %p87 = scmp.eq.s32.totalorder %s8, 0
    %p88 = por %p86, %p87
    %p89 = scmp.ne.s32.totalorder %s78, %s81
    %p90 = scmp.eq.s32.totalorder %s13, 1
    %p91 = por %p89, %p90
    %p92 = scmp.ne.s32.totalorder %s81, %s82
    %p93 = scmp.eq.s32.totalorder %s13, 0
    %p94 = por %p92, %p93
    %p95 = scmp.ne.s32.totalorder %s81, %s82
    %p96 = scmp.eq.s32.totalorder %s14, 1
    %p97 = por %p95, %p96
    %p99 = scmp.ne.s32.totalorder %s82, %s98
    %p100 = scmp.eq.s32.totalorder %s14, 0
    %p101 = por %p99, %p100
    %s102 = ssub.s32 %s15, %s41
    %s103 = ssub.s32 %s16, %s37
    %s104 = sor.u32 %s102, %s103
    %s105 = ssub.s32 %s17, %s33
    %s106 = sor.u32 %s104, %s105
    %p107 = scmp.eq.s32.totalorder %s106, 0
    %s109 = sadd.s32 %s108, 1
    %s110 = scalar_select %p107, %s108, %s109
    %p113 = pneg %p107
    %p114 = scmp.eq.s32.totalorder %s8, 1
    %p115 = por %p113, %p114
    %p116 = scmp.ne.s32.totalorder %s108, %s111
    %p117 = scmp.eq.s32.totalorder %s8, 0
    %p118 = por %p116, %p117
    %p119 = scmp.ne.s32.totalorder %s108, %s111
    %p120 = scmp.eq.s32.totalorder %s13, 1
    %p121 = por %p119, %p120
    %p122 = scmp.ne.s32.totalorder %s111, %s112
    %p123 = scmp.eq.s32.totalorder %s13, 0
    %p124 = por %p122, %p123
    %p125 = scmp.ne.s32.totalorder %s111, %s112
    %p126 = scmp.eq.s32.totalorder %s14, 1
    %p127 = por %p125, %p126
    %p129 = scmp.ne.s32.totalorder %s112, %s128
    %p130 = scmp.eq.s32.totalorder %s14, 0
    %p131 = por %p129, %p130
    %p132 = scmp.le.s32.totalorder 1, %s8
    %p133 = scmp.lt.s32.totalorder %s8, 3
    %p134 = pnand %p132, %p133
    %p135 = pneg %p134
    // Predicated region
    $region9: #{graph_convolution.2} parent=5 // pred_check
      _
    $region10: #{graph_convolution.2} parent=5 // pred_check_branch
      %137 = sbr.rel (%p134) target = $region12
    $region11: #{graph_convolution.2} parent=5 // pred_region
      %s138 = ssub.s32 %s8, 1
    $region12: #{graph_convolution.2} parent=5 // pred_fallthru
      _
    %p139 = scmp.lt.s32.totalorder %s8, 2
    // Predicated region
    $region13: #{graph_convolution.2} parent=5 // pred_check
      %p140 = pneg %p139
    $region14: #{graph_convolution.2} parent=5 // pred_check_branch
      %142 = sbr.rel (%p140) target = $region16
    $region15: #{graph_convolution.2} parent=5 // pred_region
      // Predicated region
      $region17: #{graph_convolution.2} parent=15 // pred_check
        %p143 = pneg %p58
      $region18: #{graph_convolution.2} parent=15 // pred_check_branch
        %145 = sbr.rel (%p143) target = $region20
      $region19: #{graph_convolution.2} parent=15 // pred_region
        %s146 = smul.u32 2, %s16
        %p147 = scmp.lt.s32.totalorder %s15, 1
        %s148 = scalar_select %p147, %s15, 1
        %p149 = scmp.lt.s32.totalorder %s146, 1
        %s150 = scalar_select %p149, %s146, 1
        %p151 = scmp.lt.s32.totalorder %s18, 0
        %s152 = scalar_select %p151, %s18, 0
        %s153 = sadd.s32 %s152, %s150
        %s154 = smul.addr %s148, 2
        %s155 = sadd.s32 %s153, %s154
        %s156 = smul.addr %s155, 8
        %s157 = scalar_lea.vmem %s0, %s156
        %s158 = smul.u32 2, %s16
      $region20: #{graph_convolution.2} parent=15 // pred_fallthru
        _
      // Predicated region
      $region21: #{graph_convolution.2} parent=15 // pred_check
        %p159 = pneg %p88
      $region22: #{graph_convolution.2} parent=15 // pred_check_branch
        %161 = sbr.rel (%p159) target = $region24
      $region23: #{graph_convolution.2} parent=15 // pred_region
        %s162 = smul.u32 2, %s18
        %p163 = scmp.lt.s32.totalorder %s15, 1
        %s164 = scalar_select %p163, %s15, 1
        %p165 = scmp.lt.s32.totalorder %s162, 1
        %s166 = scalar_select %p165, %s162, 1
        %p167 = scmp.lt.s32.totalorder %s17, 0
        %s168 = scalar_select %p167, %s17, 0
        %s169 = sadd.s32 %s168, %s166
        %s170 = smul.addr %s164, 2
        %s171 = sadd.s32 %s169, %s170
        %s172 = smul.addr %s171, 8
        %s173 = scalar_lea.vmem %s1, %s172
        %s174 = smul.u32 2, %s18
      $region24: #{graph_convolution.2} parent=15 // pred_fallthru
        _
    $region16: #{graph_convolution.2} parent=5 // pred_fallthru
      _
    %p175 = scmp.le.s32.totalorder 1, %s8
    %p176 = scmp.lt.s32.totalorder %s8, 3
    %p177 = pnand %p175, %p176
    %p178 = pneg %p177
    // Predicated region
    $region25: #{graph_convolution.2} parent=5 // pred_check
      _
    $region26: #{graph_convolution.2} parent=5 // pred_check_branch
      %180 = sbr.rel (%p177) target = $region28
    $region27: #{graph_convolution.2} parent=5 // pred_region
      %s181 = ssub.s32 %s8, 1
      %s182 = smul.u32 2, %s20
      %p183 = scmp.lt.s32.totalorder %s19, 1
      %s184 = scalar_select %p183, %s19, 1
      %p185 = scmp.lt.s32.totalorder %s182, 1
      %s186 = scalar_select %p185, %s182, 1
      %p187 = scmp.lt.s32.totalorder %s22, 0
      %s188 = scalar_select %p187, %s22, 0
      %s189 = sadd.s32 %s188, %s186
      %s190 = smul.addr %s184, 2
      %s191 = sadd.s32 %s189, %s190
      %s192 = smul.addr %s191, 8
      %s193 = scalar_lea.vmem %s0, %s192
      %p194 = pneg %p64
      %p195 = pneg %p61
      %s196 = smul.u32 2, %s22
      %p197 = scmp.lt.s32.totalorder %s19, 1
      %s198 = scalar_select %p197, %s19, 1
      %p199 = scmp.lt.s32.totalorder %s196, 1
      %s200 = scalar_select %p199, %s196, 1
      %p201 = scmp.lt.s32.totalorder %s21, 0
      %s202 = scalar_select %p201, %s21, 0
      %s203 = sadd.s32 %s202, %s200
      %s204 = smul.addr %s198, 2
      %s205 = sadd.s32 %s203, %s204
      %s206 = smul.addr %s205, 8
      %s207 = scalar_lea.vmem %s1, %s206
      %p208 = pneg %p94
      %p209 = pneg %p91
      %p210 = pneg %p124
      %p211 = pneg %p121
      %s212 = smul.u32 2, %s20
      %p213 = scmp.lt.s32.totalorder %s19, 1
      %s214 = scalar_select %p213, %s19, 1
      %p215 = scmp.lt.s32.totalorder %s212, 1
      %s216 = scalar_select %p215, %s212, 1
      %p217 = scmp.lt.s32.totalorder %s21, 0
      %s218 = scalar_select %p217, %s21, 0
      %s219 = sadd.s32 %s218, %s216
      %s220 = smul.addr %s214, 2
      %s221 = sadd.s32 %s219, %s220
      %s222 = smul.addr %s221, 8
      %s223 = scalar_lea.vmem %s2, %s222
      %s224 = smul.u32 2, %s20
      %p225 = scmp.lt.s32.totalorder %s19, 1
      %s226 = scalar_select %p225, %s19, 1
      %p227 = scmp.lt.s32.totalorder %s224, 1
      %s228 = scalar_select %p227, %s224, 1
      %p229 = scmp.lt.s32.totalorder %s22, 0
      %s230 = scalar_select %p229, %s22, 0
      %s231 = sadd.s32 %s230, %s228
      %s232 = smul.addr %s226, 2
      %s233 = sadd.s32 %s231, %s232
      %s234 = smul.addr %s233, 8
      %s235 = scalar_lea.vmem %s0, %s234
      %s236 = smul.u32 2, %s20
      %s237 = smul.u32 2, %s22
      %p238 = scmp.lt.s32.totalorder %s19, 1
      %s239 = scalar_select %p238, %s19, 1
      %p240 = scmp.lt.s32.totalorder %s237, 1
      %s241 = scalar_select %p240, %s237, 1
      %p242 = scmp.lt.s32.totalorder %s21, 0
      %s243 = scalar_select %p242, %s21, 0
      %s244 = sadd.s32 %s243, %s241
      %s245 = smul.addr %s239, 2
      %s246 = sadd.s32 %s244, %s245
      %s247 = smul.addr %s246, 8
      %s248 = scalar_lea.vmem %s1, %s247
      %s249 = smul.u32 2, %s22
      %s250 = smul.u32 2, %s20
      %p251 = scmp.lt.s32.totalorder %s19, 1
      %s252 = scalar_select %p251, %s19, 1
      %p253 = scmp.lt.s32.totalorder %s250, 1
      %s254 = scalar_select %p253, %s250, 1
      %p255 = scmp.lt.s32.totalorder %s21, 0
      %s256 = scalar_select %p255, %s21, 0
      %s257 = sadd.s32 %s256, %s254
      %s258 = smul.addr %s252, 2
      %s259 = sadd.s32 %s257, %s258
      %s260 = smul.addr %s259, 8
      %s261 = scalar_lea.vmem %s2, %s260
      %s262 = smul.u32 2, %s20
      %v263 = vld [vmem:[%s248] sm:$0xff]
      %v264 = vld [vmem:[%s248 + $0x8] sm:$0xff]
      %v265 = vld [vmem:[%s235] sm:$0xff]
      %v266 = vld [vmem:[%s235 + $0x8] sm:$0xff]
      %vm267 = vcmask 130048
      %v269 = vsel %vm267, %v265, 0
      %v272 = vsel %vm267, %v266, 0
      %274 = vmatprep.subr.mxu0 0.0
      %275 = vmatpush1.msra.mxu0 %v263
      %276 = vmatprep.subr.mxu0 0.0
      %277 = vmatpush1.msra.mxu0 %v264
      %278 = vmatprep.subr.mxu0 0.0
      %279 = vmatpush1.msra.mxu0 0.0
      %280 = vmatprep.subr.mxu0 0.0
      %281 = vmatpush1.msra.mxu0 0.0
      %282 = vmatprep.subr.mxu0 0.0
      %283 = vmatpush1.msra.mxu0 0.0
      %284 = vmatprep.subr.mxu0 0.0
      %285 = vmatpush1.msra.mxu0 0.0
      %286 = vmatprep.subr.mxu0 0.0
      %287 = vmatpush1.msra.mxu0 0.0
      %288 = vmatprep.subr.mxu0 0.0
      %289 = vmatpush1.msra.mxu0 0.0
      %290 = vmatprep.subr.mxu0 0.0
      %291 = vmatpush1.msra.mxu0 0.0
      %292 = vmatprep.subr.mxu0 0.0
      %293 = vmatpush1.msra.mxu0 0.0
      %294 = vmatprep.subr.mxu0 0.0
      %295 = vmatpush1.msra.mxu0 0.0
      %296 = vmatprep.subr.mxu0 0.0
      %297 = vmatpush1.msra.mxu0 0.0
      %298 = vmatprep.subr.mxu0 0.0
      %299 = vmatpush1.msra.mxu0 0.0
      %300 = vmatprep.subr.mxu0 0.0
      %301 = vmatpush1.msra.mxu0 0.0
      %302 = vmatprep.subr.mxu0 0.0
      %303 = vmatpush1.msra.mxu0 0.0
      %304 = vmatprep.subr.mxu0 0.0
      %305 = vmatpush1.msra.mxu0 0.0
      %306 = vmatprep.subr.mxu0 0.0
      %307 = vmatpush1.msra.mxu0 0.0
      %308 = vmatprep.subr.mxu0 0.0
      %309 = vmatpush1.msra.mxu0 0.0
      %310 = vmatprep.subr.mxu0 0.0
      %311 = vmatpush1.msra.mxu0 0.0
      %312 = vmatprep.subr.mxu0 0.0
      %313 = vmatpush1.msra.mxu0 0.0
      %314 = vmatprep.subr.mxu0 0.0
      %315 = vmatpush1.msra.mxu0 0.0
      %316 = vmatprep.subr.mxu0 0.0
      %317 = vmatpush1.msra.mxu0 0.0
      %318 = vmatprep.subr.mxu0 0.0
      %319 = vmatpush1.msra.mxu0 0.0
      %320 = vmatprep.subr.mxu0 0.0
      %321 = vmatpush1.msra.mxu0 0.0
      %322 = vmatprep.subr.mxu0 0.0
      %323 = vmatpush1.msra.mxu0 0.0
      %324 = vmatprep.subr.mxu0 0.0
      %325 = vmatpush1.msra.mxu0 0.0
      %326 = vmatprep.subr.mxu0 0.0
      %327 = vmatpush1.msra.mxu0 0.0
      %328 = vmatprep.subr.mxu0 0.0
      %329 = vmatpush1.msra.mxu0 0.0
      %330 = vmatprep.subr.mxu0 0.0
      %331 = vmatpush1.msra.mxu0 0.0
      %332 = vmatprep.subr.mxu0 0.0
      %333 = vmatpush1.msra.mxu0 0.0
      %334 = vmatprep.subr.mxu0 0.0
      %335 = vmatpush1.msra.mxu0 0.0
      %336 = vmatprep.subr.mxu0 0.0
      %337 = vmatpush1.msra.mxu0 0.0
      %338 = vmatprep.mubr.f32.mxu0 0.0
      %339 = vmatmul.mubr.f32.gmra.mrb[0].mxu0 %v269
      %v340 = vpop.f32.mrb[0].mxu0
      %v341 = vadd.f32 0.0, %v340
      %v342 = vpop.f32.mrb[0].mxu0
      %343 = vmatprep.mubr.f32.mxu0 0.0
      %344 = vmatmul.mubr.f32.gmra.mrb[0].mxu0 %v272
      %v345 = vpop.f32.mrb[0].mxu0
      %v346 = vadd.f32 0.0, %v345
      %v347 = vpop.f32.mrb[0].mxu0
      %348 = vdwg.mxu0
      %349 = vst [vmem:[%s261] sm:$0xff] %v341
      %350 = vst [vmem:[%s261 + $0x8] sm:$0xff] %v346
      %s351 = smul.u32 2, %s20
      %p352 = scmp.lt.s32.totalorder %s19, 1
      %s353 = scalar_select %p352, %s19, 1
      %p354 = scmp.lt.s32.totalorder %s351, 1
      %s355 = scalar_select %p354, %s351, 1
      %p356 = scmp.lt.s32.totalorder %s21, 0
      %s357 = scalar_select %p356, %s21, 0
      %s358 = sadd.s32 %s357, %s355
      %s359 = smul.addr %s353, 2
      %s360 = sadd.s32 %s358, %s359
      %s361 = smul.addr %s360, 8
      %s362 = scalar_lea.vmem %s2, %s361
      // Predicated region
      $region29: #{graph_convolution.2} parent=27 // pred_check
        %p363 = pneg %p121
      $region30: #{graph_convolution.2} parent=27 // pred_check_branch
        %365 = sbr.rel (%p363) target = $region32
      $region31: #{graph_convolution.2} parent=27 // pred_region
        %s366 = smul.u32 2, %s20
      $region32: #{graph_convolution.2} parent=27 // pred_fallthru
        _
    $region28: #{graph_convolution.2} parent=5 // pred_fallthru
      _
    %p367 = scmp.le.s32.totalorder 2, %s8
    // Predicated region
    $region33: #{graph_convolution.2} parent=5 // pred_check
      %p368 = pneg %p367
    $region34: #{graph_convolution.2} parent=5 // pred_check_branch
      %370 = sbr.rel (%p368) target = $region36
    $region35: #{graph_convolution.2} parent=5 // pred_region
      %s371 = ssub.s32 %s8, 2
      // Predicated region
      $region37: #{graph_convolution.2} parent=35 // pred_check
        %p372 = pneg %p127
      $region38: #{graph_convolution.2} parent=35 // pred_check_branch
        %374 = sbr.rel (%p372) target = $region40
      $region39: #{graph_convolution.2} parent=35 // pred_region
        %s375 = smul.u32 2, %s24
        %p376 = scmp.lt.s32.totalorder %s23, 1
        %s377 = scalar_select %p376, %s23, 1
        %p378 = scmp.lt.s32.totalorder %s375, 1
        %s379 = scalar_select %p378, %s375, 1
        %p380 = scmp.lt.s32.totalorder %s25, 0
        %s381 = scalar_select %p380, %s25, 0
        %s382 = sadd.s32 %s381, %s379
        %s383 = smul.addr %s377, 2
        %s384 = sadd.s32 %s382, %s383
        %s385 = smul.addr %s384, 8
        %s386 = scalar_lea.vmem %s2, %s385
      $region40: #{graph_convolution.2} parent=35 // pred_fallthru
        _
    $region36: #{graph_convolution.2} parent=5 // pred_fallthru
      _
  $region6: #{graph_convolution.2} parent=0 // loop_footer
    %s12 = sadd.s32 1, %s8
  $region7: #{graph_convolution.2} parent=0 // loop_footer_branch
    %7 = sbr.rel target = $region3
  $region8: #{graph_convolution.2} parent=0 // loop_exit
    _

</llo_original>
